<compile_context>
chip_gen: v5e
topology: v5e:2x2
jax: 0.10.0
libtpu: 0.0.40
codegen_flags: <defaults>
</compile_context>

<pallas_src>
import functools
import math

import jax
import jax.numpy as jnp
from jax.experimental import pallas as pl
from jax.experimental.pallas import tpu as pltpu


# ----------------------------------------------------------------------------
# Gaussian taps (mirror HybridImageModel.get_kernel math, separable form)
# ----------------------------------------------------------------------------
def gaussian_taps_1d(cutoff_standarddeviation: int):
    """Normalized 1-D taps; outer(taps, taps) == the module's normalized 2-D kernel."""
    k = int(4 * cutoff_standarddeviation + 1)
    mu = k / 2.0                                   # NOTE: k/2 (not (k-1)/2), as in torch code
    sigma = float(cutoff_standarddeviation)
    vals = [math.exp(-((i - mu) ** 2) / (2.0 * sigma * sigma)) for i in range(k)]
    s = sum(vals)
    return tuple(v / s for v in vals)              # sum == 1 -> outer product sums to 1


def create_gaussian_kernel_2d(cutoff_standarddeviation: int) -> jnp.ndarray:
    """Full 2-D kernel (f32), used only by the pure-JAX reference check."""
    k = int(4 * cutoff_standarddeviation + 1)
    mu = jnp.float32(k / 2.0)
    sigma = jnp.float32(cutoff_standarddeviation)
    i = jnp.arange(k, dtype=jnp.float32)
    k1d = jnp.exp(-((i - mu) ** 2) / (2.0 * sigma ** 2))
    k2d = jnp.outer(k1d, k1d)
    return (k2d / jnp.sum(k2d)).astype(jnp.float32)


# ----------------------------------------------------------------------------
# Pallas kernel: per-batch tile (C, H, W) — separable low-pass, high, hybrid
# ----------------------------------------------------------------------------
def _hybrid_kernel(x1_ref,            # VMEM f32[C, H, W]   image1 tile (unpadded)
                   x2_ref,            # VMEM f32[C, H, W]   image2 tile (unpadded)
                   low_ref,           # VMEM f32[C, H, W]   low frequencies of image1
                   high_ref,          # VMEM f32[C, H, W]   high frequencies of image2
                   hyb_ref,           # VMEM f32[C, H, W]   hybrid image
                   xw_ref,            # VMEM f32[C, H, W+2p] scratch: W-padded slab
                   th_ref,            # VMEM f32[C, H+2p, W] scratch: H-padded slab
                   *, taps, pad: int, C: int, H: int, W: int):
    k = len(taps)
    # Zero scratch once per grid step; low-pass passes only overwrite interiors,
    # so the `pad`-wide borders stay zero (implicit "same" zero padding).
    xw_ref[...] = jnp.zeros((C, H, W + 2 * pad), jnp.float32)
    th_ref[...] = jnp.zeros((C, H + 2 * pad, W), jnp.float32)

    def lowpass(x):
        # Horizontal (lane-axis) pass with zero padding along W.
        xw_ref[:, :, pad:pad + W] = x
        tmp = jnp.zeros((C, H, W), jnp.float32)
        for dw in range(k):                       # static unrolled: k taps
            tmp = tmp + taps[dw] * xw_ref[:, :, dw:dw + W]
        # Vertical (sublane-axis) pass with zero padding along H.
        th_ref[:, pad:pad + H, :] = tmp
        out = jnp.zeros((C, H, W), jnp.float32)
        for dh in range(k):                       # static unrolled: k taps
            out = out + taps[dh] * th_ref[:, dh:dh + H, :]
        return out

    x2 = x2_ref[...]
    low1 = lowpass(x1_ref[...])
    low2 = lowpass(x2)
    high = x2 - low2
    low_ref[...] = low1
    high_ref[...] = high
    hyb_ref[...] = jnp.clip(low1 + high, 0.0, 1.0)


# ----------------------------------------------------------------------------
# Wrapper
# ----------------------------------------------------------------------------
def hybrid_image_forward(image1: jnp.ndarray,
                         image2: jnp.ndarray,
                         cutoff_standarddeviation: int):
    """image1, image2: f32[B, C, H, W] (NCHW). Returns (low, high, hybrid).

    cutoff_standarddeviation must be a static Python int (it sizes the unrolled
    tap loop and the padding), mirroring how the torch module uses it.
    """
    B, C, H, W = image1.shape
    assert image2.shape == image1.shape
    assert C == 3, "PyTorch module hardcodes 3-channel kernel / groups=3"

    taps = gaussian_taps_1d(cutoff_standarddeviation)
    k = len(taps)
    pad = int((k - 1) / 2 + 0.5)                  # same formula as low_pass()

    image1 = image1.astype(jnp.float32)
    image2 = image2.astype(jnp.float32)

    kern = functools.partial(_hybrid_kernel, taps=taps, pad=pad, C=C, H=H, W=W)

    block = pl.BlockSpec((None, C, H, W), lambda b: (b, 0, 0, 0))
    out_shape = [jax.ShapeDtypeStruct((B, C, H, W), jnp.float32)] * 3

    # TODO(synk): for large images, add an H-tile (with `pad`-row halo) grid axis
    # and 128-lane-multiple W tiling so outputs stay lane-dense and per-step
    # buffers fit the VMEM budget (esp. v7x 64 MiB / v5e 16 MiB scoped default).
    low, high, hyb = pl.pallas_call(
        kern,
        grid=(B,),
        in_specs=[block, block],
        out_specs=[block, block, block],
        out_shape=out_shape,
        scratch_shapes=[
            pltpu.VMEM((C, H, W + 2 * pad), jnp.float32),   # W-padded slab (horizontal pass)
            pltpu.VMEM((C, H + 2 * pad, W), jnp.float32),   # H-padded slab (vertical pass)
        ],
        compiler_params=pltpu.CompilerParams(
            dimension_semantics=("parallel",)),
    )(image1, image2)
    return low, high, hyb


# ----------------------------------------------------------------------------
# Pure-JAX reference (lax depthwise conv, full 2-D kernel) for correctness
# ----------------------------------------------------------------------------
def _reference(image1, image2, cutoff):
    k2d = create_gaussian_kernel_2d(cutoff)
    k = int(k2d.shape[0])
    pad = int((k - 1) / 2 + 0.5)
    w = jnp.broadcast_to(k2d, (3, 1, k, k))       # OIHW, groups=3

    def conv(x):
        return jax.lax.conv_general_dilated(
            x, w, window_strides=(1, 1),
            padding=((pad, pad), (pad, pad)),
            dimension_numbers=("NCHW", "OIHW", "NCHW"),
            feature_group_count=3,
            precision=jax.lax.Precision.HIGHEST)

    low1 = conv(image1)
    low2 = conv(image2)
    high = image2 - low2
    hyb = jnp.clip(low1 + high, 0.0, 1.0)
    return low1, high, hyb


if __name__ == "__main__":
    key = jax.random.PRNGKey(0)
    k1, k2 = jax.random.split(key)
    B, C, H, W = 2, 3, 16, 16
    image1 = jax.random.uniform(k1, (B, C, H, W), dtype=jnp.float32)
    image2 = jax.random.uniform(k2, (B, C, H, W), dtype=jnp.float32)
    cutoff = 1   # torch forward passes a per-batch tensor but get_kernel treats it as a scalar

    low, high, hyb = hybrid_image_forward(image1, image2, cutoff)
    jax.block_until_ready((low, high, hyb))

    low_r, high_r, hyb_r = _reference(image1, image2, cutoff)
    assert low.shape == (B, C, H, W) and high.shape == (B, C, H, W) and hyb.shape == (B, C, H, W)
    assert jnp.allclose(low, low_r, atol=1e-5), "low-frequency mismatch"
    assert jnp.allclose(high, high_r, atol=1e-5), "high-frequency mismatch"
    assert jnp.allclose(hyb, hyb_r, atol=1e-5), "hybrid mismatch"

    print("KERNEL_OK")
</pallas_src>

<mosaic_0001>
module attributes {stable_mosaic.version = 11 : i64} {
  func.func @_hybrid_kernel(%arg0: i32, %arg1: memref<1x3x16x16xf32, #tpu.memory_space<vmem>>, %arg2: memref<1x3x16x16xf32, #tpu.memory_space<vmem>>, %arg3: memref<1x3x16x16xf32, #tpu.memory_space<vmem>>, %arg4: memref<1x3x16x16xf32, #tpu.memory_space<vmem>>, %arg5: memref<1x3x16x16xf32, #tpu.memory_space<vmem>>, %arg6: memref<3x16x20xf32, #tpu.memory_space<vmem>>, %arg7: memref<3x20x16xf32, #tpu.memory_space<vmem>>) attributes {dimension_semantics = [#tpu.dimension_semantics<parallel>], iteration_bounds = array<i64: 2>, scalar_prefetch = 0 : i64, scratch_operands = 2 : i64, tpu.core_type = #tpu.core_type<tc>, window_params = [{transform_indices = @transform_0, window_bounds = array<i64: 1, 3, 16, 16>}, {transform_indices = @transform_1, window_bounds = array<i64: 1, 3, 16, 16>}, {transform_indices = @transform_2, window_bounds = array<i64: 1, 3, 16, 16>}, {transform_indices = @transform_3, window_bounds = array<i64: 1, 3, 16, 16>}, {transform_indices = @transform_4, window_bounds = array<i64: 1, 3, 16, 16>}]} {
    %cst = arith.constant 0.000000e+00 : f32
    %0 = vector.broadcast %cst : f32 to vector<3x16x20xf32>
    %c0 = arith.constant 0 : index
    %c0_0 = arith.constant 0 : index
    %c0_1 = arith.constant 0 : index
    %1 = vector.load %arg6[%c0, %c0_0, %c0_1] : memref<3x16x20xf32, #tpu.memory_space<vmem>>, vector<3x16x20xf32>
    tpu.vector_store %arg6[%c0, %c0_0, %c0_1], %0 {strides = array<i32>} : memref<3x16x20xf32, #tpu.memory_space<vmem>>, vector<3x16x20xf32>,
    %cst_2 = arith.constant 0.000000e+00 : f32
    %2 = vector.broadcast %cst_2 : f32 to vector<3x20x16xf32>
    %c0_3 = arith.constant 0 : index
    %c0_4 = arith.constant 0 : index
    %c0_5 = arith.constant 0 : index
    %3 = vector.load %arg7[%c0_3, %c0_4, %c0_5] : memref<3x20x16xf32, #tpu.memory_space<vmem>>, vector<3x20x16xf32>
    tpu.vector_store %arg7[%c0_3, %c0_4, %c0_5], %2 {strides = array<i32>} : memref<3x20x16xf32, #tpu.memory_space<vmem>>, vector<3x20x16xf32>,
    %c0_6 = arith.constant 0 : index
    %c0_7 = arith.constant 0 : index
    %c0_8 = arith.constant 0 : index
    %c0_9 = arith.constant 0 : index
    %4 = vector.load %arg2[%c0_6, %c0_7, %c0_8, %c0_9] : memref<1x3x16x16xf32, #tpu.memory_space<vmem>>, vector<1x3x16x16xf32>
    %5 = vector.shape_cast %4 : vector<1x3x16x16xf32> to vector<3x16x16xf32>
    %c0_10 = arith.constant 0 : index
    %c0_11 = arith.constant 0 : index
    %c0_12 = arith.constant 0 : index
    %c0_13 = arith.constant 0 : index
    %6 = vector.load %arg1[%c0_10, %c0_11, %c0_12, %c0_13] : memref<1x3x16x16xf32, #tpu.memory_space<vmem>>, vector<1x3x16x16xf32>
    %7 = vector.shape_cast %6 : vector<1x3x16x16xf32> to vector<3x16x16xf32>
    %c0_14 = arith.constant 0 : index
    %c0_15 = arith.constant 0 : index
    %c2 = arith.constant 2 : index
    %8 = vector.load %arg6[%c0_14, %c0_15, %c2] : memref<3x16x20xf32, #tpu.memory_space<vmem>>, vector<3x16x16xf32>
    tpu.vector_store %arg6[%c0_14, %c0_15, %c2], %7 {strides = array<i32>} : memref<3x16x20xf32, #tpu.memory_space<vmem>>, vector<3x16x16xf32>,
    %cst_16 = arith.constant 0.000000e+00 : f32
    %9 = vector.broadcast %cst_16 : f32 to vector<3x16x16xf32>
    %c0_17 = arith.constant 0 : index
    %c0_18 = arith.constant 0 : index
    %c0_19 = arith.constant 0 : index
    %10 = vector.load %arg6[%c0_17, %c0_18, %c0_19] : memref<3x16x20xf32, #tpu.memory_space<vmem>>, vector<3x16x16xf32>
    %cst_20 = arith.constant 0.0178733617 : f32
    %11 = vector.broadcast %cst_20 : f32 to vector<3x16x16xf32>
    %12 = arith.mulf %11, %10 : vector<3x16x16xf32>
    %13 = arith.addf %9, %12 : vector<3x16x16xf32>
    %c0_21 = arith.constant 0 : index
    %c0_22 = arith.constant 0 : index
    %c1 = arith.constant 1 : index
    %14 = vector.load %arg6[%c0_21, %c0_22, %c1] : memref<3x16x20xf32, #tpu.memory_space<vmem>>, vector<3x16x16xf32>
    %cst_23 = arith.constant 0.132067263 : f32
    %15 = vector.broadcast %cst_23 : f32 to vector<3x16x16xf32>
    %16 = arith.mulf %15, %14 : vector<3x16x16xf32>
    %17 = arith.addf %13, %16 : vector<3x16x16xf32>
    %c0_24 = arith.constant 0 : index
    %c0_25 = arith.constant 0 : index
    %c2_26 = arith.constant 2 : index
    %18 = vector.load %arg6[%c0_24, %c0_25, %c2_26] : memref<3x16x20xf32, #tpu.memory_space<vmem>>, vector<3x16x16xf32>
    %cst_27 = arith.constant 0.358996063 : f32
    %19 = vector.broadcast %cst_27 : f32 to vector<3x16x16xf32>
    %20 = arith.mulf %19, %18 : vector<3x16x16xf32>
    %21 = arith.addf %17, %20 : vector<3x16x16xf32>
    %c0_28 = arith.constant 0 : index
    %c0_29 = arith.constant 0 : index
    %c3 = arith.constant 3 : index
    %22 = vector.load %arg6[%c0_28, %c0_29, %c3] : memref<3x16x20xf32, #tpu.memory_space<vmem>>, vector<3x16x16xf32>
    %cst_30 = arith.constant 0.358996063 : f32
    %23 = vector.broadcast %cst_30 : f32 to vector<3x16x16xf32>
    %24 = arith.mulf %23, %22 : vector<3x16x16xf32>
    %25 = arith.addf %21, %24 : vector<3x16x16xf32>
    %c0_31 = arith.constant 0 : index
    %c0_32 = arith.constant 0 : index
    %c4 = arith.constant 4 : index
    %26 = vector.load %arg6[%c0_31, %c0_32, %c4] : memref<3x16x20xf32, #tpu.memory_space<vmem>>, vector<3x16x16xf32>
    %cst_33 = arith.constant 0.132067263 : f32
    %27 = vector.broadcast %cst_33 : f32 to vector<3x16x16xf32>
    %28 = arith.mulf %27, %26 : vector<3x16x16xf32>
    %29 = arith.addf %25, %28 : vector<3x16x16xf32>
    %c0_34 = arith.constant 0 : index
    %c2_35 = arith.constant 2 : index
    %c0_36 = arith.constant 0 : index
    %30 = vector.load %arg7[%c0_34, %c2_35, %c0_36] : memref<3x20x16xf32, #tpu.memory_space<vmem>>, vector<3x16x16xf32>
    tpu.vector_store %arg7[%c0_34, %c2_35, %c0_36], %29 {strides = array<i32>} : memref<3x20x16xf32, #tpu.memory_space<vmem>>, vector<3x16x16xf32>,
    %cst_37 = arith.constant 0.000000e+00 : f32
    %31 = vector.broadcast %cst_37 : f32 to vector<3x16x16xf32>
    %c0_38 = arith.constant 0 : index
    %c0_39 = arith.constant 0 : index
    %c0_40 = arith.constant 0 : index
    %32 = vector.load %arg7[%c0_38, %c0_39, %c0_40] : memref<3x20x16xf32, #tpu.memory_space<vmem>>, vector<3x16x16xf32>
    %cst_41 = arith.constant 0.0178733617 : f32
    %33 = vector.broadcast %cst_41 : f32 to vector<3x16x16xf32>
    %34 = arith.mulf %33, %32 : vector<3x16x16xf32>
    %35 = arith.addf %31, %34 : vector<3x16x16xf32>
    %c0_42 = arith.constant 0 : index
    %c1_43 = arith.constant 1 : index
    %c0_44 = arith.constant 0 : index
    %36 = vector.load %arg7[%c0_42, %c1_43, %c0_44] : memref<3x20x16xf32, #tpu.memory_space<vmem>>, vector<3x16x16xf32>
    %cst_45 = arith.constant 0.132067263 : f32
    %37 = vector.broadcast %cst_45 : f32 to vector<3x16x16xf32>
    %38 = arith.mulf %37, %36 : vector<3x16x16xf32>
    %39 = arith.addf %35, %38 : vector<3x16x16xf32>
    %c0_46 = arith.constant 0 : index
    %c2_47 = arith.constant 2 : index
    %c0_48 = arith.constant 0 : index
    %40 = vector.load %arg7[%c0_46, %c2_47, %c0_48] : memref<3x20x16xf32, #tpu.memory_space<vmem>>, vector<3x16x16xf32>
    %cst_49 = arith.constant 0.358996063 : f32
    %41 = vector.broadcast %cst_49 : f32 to vector<3x16x16xf32>
    %42 = arith.mulf %41, %40 : vector<3x16x16xf32>
    %43 = arith.addf %39, %42 : vector<3x16x16xf32>
    %c0_50 = arith.constant 0 : index
    %c3_51 = arith.constant 3 : index
    %c0_52 = arith.constant 0 : index
    %44 = vector.load %arg7[%c0_50, %c3_51, %c0_52] : memref<3x20x16xf32, #tpu.memory_space<vmem>>, vector<3x16x16xf32>
    %cst_53 = arith.constant 0.358996063 : f32
    %45 = vector.broadcast %cst_53 : f32 to vector<3x16x16xf32>
    %46 = arith.mulf %45, %44 : vector<3x16x16xf32>
    %47 = arith.addf %43, %46 : vector<3x16x16xf32>
    %c0_54 = arith.constant 0 : index
    %c4_55 = arith.constant 4 : index
    %c0_56 = arith.constant 0 : index
    %48 = vector.load %arg7[%c0_54, %c4_55, %c0_56] : memref<3x20x16xf32, #tpu.memory_space<vmem>>, vector<3x16x16xf32>
    %cst_57 = arith.constant 0.132067263 : f32
    %49 = vector.broadcast %cst_57 : f32 to vector<3x16x16xf32>
    %50 = arith.mulf %49, %48 : vector<3x16x16xf32>
    %51 = arith.addf %47, %50 : vector<3x16x16xf32>
    %c0_58 = arith.constant 0 : index
    %c0_59 = arith.constant 0 : index
    %c2_60 = arith.constant 2 : index
    %52 = vector.load %arg6[%c0_58, %c0_59, %c2_60] : memref<3x16x20xf32, #tpu.memory_space<vmem>>, vector<3x16x16xf32>
    tpu.vector_store %arg6[%c0_58, %c0_59, %c2_60], %5 {strides = array<i32>} : memref<3x16x20xf32, #tpu.memory_space<vmem>>, vector<3x16x16xf32>,
    %cst_61 = arith.constant 0.000000e+00 : f32
    %53 = vector.broadcast %cst_61 : f32 to vector<3x16x16xf32>
    %c0_62 = arith.constant 0 : index
    %c0_63 = arith.constant 0 : index
    %c0_64 = arith.constant 0 : index
    %54 = vector.load %arg6[%c0_62, %c0_63, %c0_64] : memref<3x16x20xf32, #tpu.memory_space<vmem>>, vector<3x16x16xf32>
    %cst_65 = arith.constant 0.0178733617 : f32
    %55 = vector.broadcast %cst_65 : f32 to vector<3x16x16xf32>
    %56 = arith.mulf %55, %54 : vector<3x16x16xf32>
    %57 = arith.addf %53, %56 : vector<3x16x16xf32>
    %c0_66 = arith.constant 0 : index
    %c0_67 = arith.constant 0 : index
    %c1_68 = arith.constant 1 : index
    %58 = vector.load %arg6[%c0_66, %c0_67, %c1_68] : memref<3x16x20xf32, #tpu.memory_space<vmem>>, vector<3x16x16xf32>
    %cst_69 = arith.constant 0.132067263 : f32
    %59 = vector.broadcast %cst_69 : f32 to vector<3x16x16xf32>
    %60 = arith.mulf %59, %58 : vector<3x16x16xf32>
    %61 = arith.addf %57, %60 : vector<3x16x16xf32>
    %c0_70 = arith.constant 0 : index
    %c0_71 = arith.constant 0 : index
    %c2_72 = arith.constant 2 : index
    %62 = vector.load %arg6[%c0_70, %c0_71, %c2_72] : memref<3x16x20xf32, #tpu.memory_space<vmem>>, vector<3x16x16xf32>
    %cst_73 = arith.constant 0.358996063 : f32
    %63 = vector.broadcast %cst_73 : f32 to vector<3x16x16xf32>
    %64 = arith.mulf %63, %62 : vector<3x16x16xf32>
    %65 = arith.addf %61, %64 : vector<3x16x16xf32>
    %c0_74 = arith.constant 0 : index
    %c0_75 = arith.constant 0 : index
    %c3_76 = arith.constant 3 : index
    %66 = vector.load %arg6[%c0_74, %c0_75, %c3_76] : memref<3x16x20xf32, #tpu.memory_space<vmem>>, vector<3x16x16xf32>
    %cst_77 = arith.constant 0.358996063 : f32
    %67 = vector.broadcast %cst_77 : f32 to vector<3x16x16xf32>
    %68 = arith.mulf %67, %66 : vector<3x16x16xf32>
    %69 = arith.addf %65, %68 : vector<3x16x16xf32>
    %c0_78 = arith.constant 0 : index
    %c0_79 = arith.constant 0 : index
    %c4_80 = arith.constant 4 : index
    %70 = vector.load %arg6[%c0_78, %c0_79, %c4_80] : memref<3x16x20xf32, #tpu.memory_space<vmem>>, vector<3x16x16xf32>
    %cst_81 = arith.constant 0.132067263 : f32
    %71 = vector.broadcast %cst_81 : f32 to vector<3x16x16xf32>
    %72 = arith.mulf %71, %70 : vector<3x16x16xf32>
    %73 = arith.addf %69, %72 : vector<3x16x16xf32>
    %c0_82 = arith.constant 0 : index
    %c2_83 = arith.constant 2 : index
    %c0_84 = arith.constant 0 : index
    %74 = vector.load %arg7[%c0_82, %c2_83, %c0_84] : memref<3x20x16xf32, #tpu.memory_space<vmem>>, vector<3x16x16xf32>
    tpu.vector_store %arg7[%c0_82, %c2_83, %c0_84], %73 {strides = array<i32>} : memref<3x20x16xf32, #tpu.memory_space<vmem>>, vector<3x16x16xf32>,
    %cst_85 = arith.constant 0.000000e+00 : f32
    %75 = vector.broadcast %cst_85 : f32 to vector<3x16x16xf32>
    %c0_86 = arith.constant 0 : index
    %c0_87 = arith.constant 0 : index
    %c0_88 = arith.constant 0 : index
    %76 = vector.load %arg7[%c0_86, %c0_87, %c0_88] : memref<3x20x16xf32, #tpu.memory_space<vmem>>, vector<3x16x16xf32>
    %cst_89 = arith.constant 0.0178733617 : f32
    %77 = vector.broadcast %cst_89 : f32 to vector<3x16x16xf32>
    %78 = arith.mulf %77, %76 : vector<3x16x16xf32>
    %79 = arith.addf %75, %78 : vector<3x16x16xf32>
    %c0_90 = arith.constant 0 : index
    %c1_91 = arith.constant 1 : index
    %c0_92 = arith.constant 0 : index
    %80 = vector.load %arg7[%c0_90, %c1_91, %c0_92] : memref<3x20x16xf32, #tpu.memory_space<vmem>>, vector<3x16x16xf32>
    %cst_93 = arith.constant 0.132067263 : f32
    %81 = vector.broadcast %cst_93 : f32 to vector<3x16x16xf32>
    %82 = arith.mulf %81, %80 : vector<3x16x16xf32>
    %83 = arith.addf %79, %82 : vector<3x16x16xf32>
    %c0_94 = arith.constant 0 : index
    %c2_95 = arith.constant 2 : index
    %c0_96 = arith.constant 0 : index
    %84 = vector.load %arg7[%c0_94, %c2_95, %c0_96] : memref<3x20x16xf32, #tpu.memory_space<vmem>>, vector<3x16x16xf32>
    %cst_97 = arith.constant 0.358996063 : f32
    %85 = vector.broadcast %cst_97 : f32 to vector<3x16x16xf32>
    %86 = arith.mulf %85, %84 : vector<3x16x16xf32>
    %87 = arith.addf %83, %86 : vector<3x16x16xf32>
    %c0_98 = arith.constant 0 : index
    %c3_99 = arith.constant 3 : index
    %c0_100 = arith.constant 0 : index
    %88 = vector.load %arg7[%c0_98, %c3_99, %c0_100] : memref<3x20x16xf32, #tpu.memory_space<vmem>>, vector<3x16x16xf32>
    %cst_101 = arith.constant 0.358996063 : f32
    %89 = vector.broadcast %cst_101 : f32 to vector<3x16x16xf32>
    %90 = arith.mulf %89, %88 : vector<3x16x16xf32>
    %91 = arith.addf %87, %90 : vector<3x16x16xf32>
    %c0_102 = arith.constant 0 : index
    %c4_103 = arith.constant 4 : index
    %c0_104 = arith.constant 0 : index
    %92 = vector.load %arg7[%c0_102, %c4_103, %c0_104] : memref<3x20x16xf32, #tpu.memory_space<vmem>>, vector<3x16x16xf32>
    %cst_105 = arith.constant 0.132067263 : f32
    %93 = vector.broadcast %cst_105 : f32 to vector<3x16x16xf32>
    %94 = arith.mulf %93, %92 : vector<3x16x16xf32>
    %95 = arith.addf %91, %94 : vector<3x16x16xf32>
    %96 = arith.subf %5, %95 : vector<3x16x16xf32>
    %c0_106 = arith.constant 0 : index
    %c0_107 = arith.constant 0 : index
    %c0_108 = arith.constant 0 : index
    %c0_109 = arith.constant 0 : index
    %97 = vector.load %arg3[%c0_106, %c0_107, %c0_108, %c0_109] : memref<1x3x16x16xf32, #tpu.memory_space<vmem>>, vector<1x3x16x16xf32>
    %98 = vector.shape_cast %97 : vector<1x3x16x16xf32> to vector<3x16x16xf32>
    %99 = vector.shape_cast %51 : vector<3x16x16xf32> to vector<1x3x16x16xf32>
    tpu.vector_store %arg3[%c0_106, %c0_107, %c0_108, %c0_109], %99 {strides = array<i32>} : memref<1x3x16x16xf32, #tpu.memory_space<vmem>>, vector<1x3x16x16xf32>,
    %c0_110 = arith.constant 0 : index
    %c0_111 = arith.constant 0 : index
    %c0_112 = arith.constant 0 : index
    %c0_113 = arith.constant 0 : index
    %100 = vector.load %arg4[%c0_110, %c0_111, %c0_112, %c0_113] : memref<1x3x16x16xf32, #tpu.memory_space<vmem>>, vector<1x3x16x16xf32>
    %101 = vector.shape_cast %100 : vector<1x3x16x16xf32> to vector<3x16x16xf32>
    %102 = vector.shape_cast %96 : vector<3x16x16xf32> to vector<1x3x16x16xf32>
    tpu.vector_store %arg4[%c0_110, %c0_111, %c0_112, %c0_113], %102 {strides = array<i32>} : memref<1x3x16x16xf32, #tpu.memory_space<vmem>>, vector<1x3x16x16xf32>,
    %103 = arith.addf %51, %96 : vector<3x16x16xf32>
    %cst_114 = arith.constant 0.000000e+00 : f32
    %cst_115 = arith.constant 1.000000e+00 : f32
    %104 = vector.broadcast %cst_114 : f32 to vector<3x16x16xf32>
    %105 = arith.maximumf %104, %103 : vector<3x16x16xf32>
    %106 = vector.broadcast %cst_115 : f32 to vector<3x16x16xf32>
    %107 = arith.minimumf %106, %105 : vector<3x16x16xf32>
    %c0_116 = arith.constant 0 : index
    %c0_117 = arith.constant 0 : index
    %c0_118 = arith.constant 0 : index
    %c0_119 = arith.constant 0 : index
    %108 = vector.load %arg5[%c0_116, %c0_117, %c0_118, %c0_119] : memref<1x3x16x16xf32, #tpu.memory_space<vmem>>, vector<1x3x16x16xf32>
    %109 = vector.shape_cast %108 : vector<1x3x16x16xf32> to vector<3x16x16xf32>
    %110 = vector.shape_cast %107 : vector<3x16x16xf32> to vector<1x3x16x16xf32>
    tpu.vector_store %arg5[%c0_116, %c0_117, %c0_118, %c0_119], %110 {strides = array<i32>} : memref<1x3x16x16xf32, #tpu.memory_space<vmem>>, vector<1x3x16x16xf32>,
    return
  }
  func.func @transform_0(%arg0: i32) -> (i32, i32, i32, i32) {
    %c0_i32 = arith.constant 0 : i32
    %c0_i32_0 = arith.constant 0 : i32
    %c0_i32_1 = arith.constant 0 : i32
    %c0_i32_2 = arith.constant 0 : i32
    return %arg0, %c0_i32, %c0_i32_0, %c0_i32_1 : i32, i32, i32, i32
  }
  func.func @transform_1(%arg0: i32) -> (i32, i32, i32, i32) {
    %c0_i32 = arith.constant 0 : i32
    %c0_i32_0 = arith.constant 0 : i32
    %c0_i32_1 = arith.constant 0 : i32
    %c0_i32_2 = arith.constant 0 : i32
    return %arg0, %c0_i32, %c0_i32_0, %c0_i32_1 : i32, i32, i32, i32
  }
  func.func @transform_2(%arg0: i32) -> (i32, i32, i32, i32) {
    %c0_i32 = arith.constant 0 : i32
    %c0_i32_0 = arith.constant 0 : i32
    %c0_i32_1 = arith.constant 0 : i32
    %c0_i32_2 = arith.constant 0 : i32
    return %arg0, %c0_i32, %c0_i32_0, %c0_i32_1 : i32, i32, i32, i32
  }
  func.func @transform_3(%arg0: i32) -> (i32, i32, i32, i32) {
    %c0_i32 = arith.constant 0 : i32
    %c0_i32_0 = arith.constant 0 : i32
    %c0_i32_1 = arith.constant 0 : i32
    %c0_i32_2 = arith.constant 0 : i32
    return %arg0, %c0_i32, %c0_i32_0, %c0_i32_1 : i32, i32, i32, i32
  }
  func.func @transform_4(%arg0: i32) -> (i32, i32, i32, i32) {
    %c0_i32 = arith.constant 0 : i32
    %c0_i32_0 = arith.constant 0 : i32
    %c0_i32_1 = arith.constant 0 : i32
    %c0_i32_2 = arith.constant 0 : i32
    return %arg0, %c0_i32, %c0_i32_0, %c0_i32_1 : i32, i32, i32, i32
  }
}

</mosaic_0001>

<llo_original>
// kernel: tpu_custom_call.1
$region0: #{tpu_custom_call.1}
  #allocation0 [shape = 'u32[]', space=smem, size = 0x4, offset = 0x4, fixed_abs, tag = 'smem constant byte address 0x4 - core index']
  #allocation1 [shape = 'u32[72,128]{1,0:T(1,128)}', space=vmem, size = 0x9000, scoped, tag = 'internal scratch']
  #allocation2 [shape = 'f32[3,16,20]{2,1,0:T(8,128)}', space=vmem, size = 0x6000, scoped, tag = 'scratch operand']
  #allocation3 [shape = 'f32[3,20,16]{2,1,0:T(8,128)}', space=vmem, size = 0x9000, scoped, tag = 'scratch operand']
  %s0 = inlined_call_operand.hbm [shape: f32[2,3,16,16], index: 0, kind: input, shape index: {}]
  %s1 = inlined_call_operand.hbm [shape: f32[2,3,16,16], index: 1, kind: input, shape index: {}]
  %s2 = inlined_call_operand.hbm [shape: f32[2,3,16,16], index: 2, kind: output, shape index: {0}]
  %s3 = inlined_call_operand.hbm [shape: f32[2,3,16,16], index: 3, kind: output, shape index: {1}]
  %s4 = inlined_call_operand.hbm [shape: f32[2,3,16,16], index: 4, kind: output, shape index: {2}]
  %5 = xla_tuple %s2, %s3, %s4
  %s6 = sld [smem:[#allocation0]]
  $region65: #{tpu_custom_call.1} parent=0
    _
  %s8 = ssub.s32 1, %s6
  %s9 = scalar_select 0, %s8, %s6
  $region1: #{tpu_custom_call.1} parent=0
    #allocation4 [shape = 'u8[49152]{0}', space=vmem, size = 0xc000, scoped, tag = 'input window, operand 0']
    #allocation5 [shape = 's32[2]{0}', space=sflag, size = 0x8, scoped, tag = 'scoped memory for tpu_custom_call.1']
    #allocation6 [shape = 's32[2]{0}', space=sflag, size = 0x8, scoped, tag = 'scoped memory for tpu_custom_call.1']
    #allocation7 [shape = 'u8[49152]{0}', space=vmem, size = 0xc000, scoped, tag = 'input window, operand 1']
    #allocation8 [shape = 's32[2]{0}', space=sflag, size = 0x8, scoped, tag = 'scoped memory for tpu_custom_call.1']
    #allocation9 [shape = 'u8[49152]{0}', space=vmem, size = 0xc000, scoped, tag = 'output window, operand 0']
    #allocation10 [shape = 'u8[49152]{0}', space=vmem, size = 0xc000, scoped, tag = 'output window, operand 1']
    #allocation11 [shape = 's32[2]{0}', space=sflag, size = 0x8, scoped, tag = 'scoped memory for tpu_custom_call.1']
    #allocation12 [shape = 'u8[49152]{0}', space=vmem, size = 0xc000, scoped, tag = 'output window, operand 2']
    %10 = vsyncpa [#allocation5], 0
    %s11 = scalar_lea.sflag [#allocation5], 1
    %12 = vsyncpa %s11, 0
    %13 = vsyncpa [#allocation8], 0
    %s14 = scalar_lea.sflag [#allocation8], 1
    %15 = vsyncpa %s14, 0
    %16 = vsyncpa [#allocation6], 0
    %s17 = scalar_lea.sflag [#allocation6], 1
    %18 = vsyncpa %s17, 0
    %19 = vsyncpa [#allocation11], 0
    %s20 = scalar_lea.sflag [#allocation11], 1
    %21 = vsyncpa %s20, 0
    loop: start=0, step=1, limit=4
    $region2: #{tpu_custom_call.1} parent=1 // loop_pre_header
      _
    $region3: #{tpu_custom_call.1} parent=1 // loop_header
      %s23 = sphi 0, %s27
      %p24 = scmp.ge.s32.totalorder %s23, 4
      %s33 = sphi 0, %s35
      %s36 = sphi 0, %s33
      %s37 = sphi 0, %s36
      %s53 = sphi 0, %s37
      %s59 = sphi 0, %s61
      %s62 = sphi 0, %s59
      %s63 = sphi 0, %s62
      %s79 = sphi 0, %s63
      %s85 = sphi 0, %s87
      %s88 = sphi 0, %s85
      %s89 = sphi 0, %s88
      %s105 = sphi 0, %s89
      %s111 = sphi 0, %s113
      %s114 = sphi 0, %s111
      %s115 = sphi 0, %s114
      %s131 = sphi 0, %s115
      %s137 = sphi 0, %s139
      %s140 = sphi 0, %s137
      %s141 = sphi 0, %s140
      %s157 = sphi 0, %s141
    $region4: #{tpu_custom_call.1} parent=1 // loop_header_branch
      %26 = sbr.rel (%p24) target = $region8
    $region5: #{tpu_custom_call.1} parent=1 // loop_body
      %s28 = ssub.s32 %s23, 1
      %s29 = ssub.s32 %s23, 2
      %s30 = sadd.s32 %s23, 1
      %s31 = ssub.s32 %s23, %s30
      %p32 = scmp.eq.s32.totalorder %s31, 0
      %s34 = sadd.s32 %s33, 1
      %s35 = scalar_select %p32, %s33, %s34
      %p38 = pneg %p32
      %p39 = scmp.eq.s32.totalorder %s23, 1
      %p40 = por %p38, %p39
      %p41 = scmp.ne.s32.totalorder %s33, %s36
      %p42 = scmp.eq.s32.totalorder %s23, 0
      %p43 = por %p41, %p42
      %p44 = scmp.ne.s32.totalorder %s33, %s36
      %p45 = scmp.eq.s32.totalorder %s28, 1
      %p46 = por %p44, %p45
      %p47 = scmp.ne.s32.totalorder %s36, %s37
      %p48 = scmp.eq.s32.totalorder %s28, 0
      %p49 = por %p47, %p48
      %p50 = scmp.ne.s32.totalorder %s36, %s37
      %p51 = scmp.eq.s32.totalorder %s29, 1
      %p52 = por %p50, %p51
      %p54 = scmp.ne.s32.totalorder %s37, %s53
      %p55 = scmp.eq.s32.totalorder %s29, 0
      %p56 = por %p54, %p55
      %s57 = ssub.s32 %s23, %s30
      %p58 = scmp.eq.s32.totalorder %s57, 0
      %s60 = sadd.s32 %s59, 1
      %s61 = scalar_select %p58, %s59, %s60
      %p64 = pneg %p58
      %p65 = scmp.eq.s32.totalorder %s23, 1
      %p66 = por %p64, %p65
      %p67 = scmp.ne.s32.totalorder %s59, %s62
      %p68 = scmp.eq.s32.totalorder %s23, 0
      %p69 = por %p67, %p68
      %p70 = scmp.ne.s32.totalorder %s59, %s62
      %p71 = scmp.eq.s32.totalorder %s28, 1
      %p72 = por %p70, %p71
      %p73 = scmp.ne.s32.totalorder %s62, %s63
      %p74 = scmp.eq.s32.totalorder %s28, 0
      %p75 = por %p73, %p74
      %p76 = scmp.ne.s32.totalorder %s62, %s63
      %p77 = scmp.eq.s32.totalorder %s29, 1
      %p78 = por %p76, %p77
      %p80 = scmp.ne.s32.totalorder %s63, %s79
      %p81 = scmp.eq.s32.totalorder %s29, 0
      %p82 = por %p80, %p81
      %s83 = ssub.s32 %s23, %s30
      %p84 = scmp.eq.s32.totalorder %s83, 0
      %s86 = sadd.s32 %s85, 1
      %s87 = scalar_select %p84, %s85, %s86
      %p90 = pneg %p84
      %p91 = scmp.eq.s32.totalorder %s23, 1
      %p92 = por %p90, %p91
      %p93 = scmp.ne.s32.totalorder %s85, %s88
      %p94 = scmp.eq.s32.totalorder %s23, 0
      %p95 = por %p93, %p94
      %p96 = scmp.ne.s32.totalorder %s85, %s88
      %p97 = scmp.eq.s32.totalorder %s28, 1
      %p98 = por %p96, %p97
      %p99 = scmp.ne.s32.totalorder %s88, %s89
      %p100 = scmp.eq.s32.totalorder %s28, 0
      %p101 = por %p99, %p100
      %p102 = scmp.ne.s32.totalorder %s88, %s89
      %p103 = scmp.eq.s32.totalorder %s29, 1
      %p104 = por %p102, %p103
      %p106 = scmp.ne.s32.totalorder %s89, %s105
      %p107 = scmp.eq.s32.totalorder %s29, 0
      %p108 = por %p106, %p107
      %s109 = ssub.s32 %s23, %s30
      %p110 = scmp.eq.s32.totalorder %s109, 0
      %s112 = sadd.s32 %s111, 1
      %s113 = scalar_select %p110, %s111, %s112
      %p116 = pneg %p110
      %p117 = scmp.eq.s32.totalorder %s23, 1
      %p118 = por %p116, %p117
      %p119 = scmp.ne.s32.totalorder %s111, %s114
      %p120 = scmp.eq.s32.totalorder %s23, 0
      %p121 = por %p119, %p120
      %p122 = scmp.ne.s32.totalorder %s111, %s114
      %p123 = scmp.eq.s32.totalorder %s28, 1
      %p124 = por %p122, %p123
      %p125 = scmp.ne.s32.totalorder %s114, %s115
      %p126 = scmp.eq.s32.totalorder %s28, 0
      %p127 = por %p125, %p126
      %p128 = scmp.ne.s32.totalorder %s114, %s115
      %p129 = scmp.eq.s32.totalorder %s29, 1
      %p130 = por %p128, %p129
      %p132 = scmp.ne.s32.totalorder %s115, %s131
      %p133 = scmp.eq.s32.totalorder %s29, 0
      %p134 = por %p132, %p133
      %s135 = ssub.s32 %s23, %s30
      %p136 = scmp.eq.s32.totalorder %s135, 0
      %s138 = sadd.s32 %s137, 1
      %s139 = scalar_select %p136, %s137, %s138
      %p142 = pneg %p136
      %p143 = scmp.eq.s32.totalorder %s23, 1
      %p144 = por %p142, %p143
      %p145 = scmp.ne.s32.totalorder %s137, %s140
      %p146 = scmp.eq.s32.totalorder %s23, 0
      %p147 = por %p145, %p146
      %p148 = scmp.ne.s32.totalorder %s137, %s140
      %p149 = scmp.eq.s32.totalorder %s28, 1
      %p150 = por %p148, %p149
      %p151 = scmp.ne.s32.totalorder %s140, %s141
      %p152 = scmp.eq.s32.totalorder %s28, 0
      %p153 = por %p151, %p152
      %p154 = scmp.ne.s32.totalorder %s140, %s141
      %p155 = scmp.eq.s32.totalorder %s29, 1
      %p156 = por %p154, %p155
      %p158 = scmp.ne.s32.totalorder %s141, %s157
      %p159 = scmp.eq.s32.totalorder %s29, 0
      %p160 = por %p158, %p159
      %p161 = scmp.le.s32.totalorder 1, %s23
      %p162 = scmp.lt.s32.totalorder %s23, 3
      %p163 = pnand %p161, %p162
      %p164 = pneg %p163
      // Predicated region
      $region9: #{tpu_custom_call.1} parent=5 // pred_check
        _
      $region10: #{tpu_custom_call.1} parent=5 // pred_check_branch
        %166 = sbr.rel (%p163) target = $region12
      $region11: #{tpu_custom_call.1} parent=5 // pred_region
        %s167 = ssub.s32 %s23, 1
      $region12: #{tpu_custom_call.1} parent=5 // pred_fallthru
        _
      %p168 = scmp.lt.s32.totalorder %s23, 2
      // Predicated region
      $region13: #{tpu_custom_call.1} parent=5 // pred_check
        %p169 = pneg %p168
      $region14: #{tpu_custom_call.1} parent=5 // pred_check_branch
        %171 = sbr.rel (%p169) target = $region16
      $region15: #{tpu_custom_call.1} parent=5 // pred_region
        // Predicated region
        $region17: #{tpu_custom_call.1} parent=15 // pred_check
          %p172 = pneg %p43
        $region18: #{tpu_custom_call.1} parent=15 // pred_check_branch
          %174 = sbr.rel (%p172) target = $region20
        $region19: #{tpu_custom_call.1} parent=15 // pred_region
          %s175 = sand.u32 %s33, 1
          %s176 = scalar_lea.sflag [#allocation5], %s175
          %s177 = sand.u32 %s33, 1
          %s178 = smul.addr %s177, 48
          %s179 = scalar_lea.vmem [#allocation4], %s178
          %181 = vsyncadd %s176, 0
          %s182 = smul.addr %s23, 6
          %s183 = smul.addr %s182, 8
          %s184 = scalar_lea.hbm %s0, %s183
          %s185 = sshll.u32 %s184, 4
          %s186 = int_to_ptr.hbm [resolvable:$true] %s185
          %s187 = sshll.u32 %s179, 4
          %s188 = int_to_ptr.vmem [resolvable:$true] %s187
          %193 = dma.hbm_to_vmem [thread:$0]  %s186, 768, %s188, %s176, 128, 128, 8
        $region20: #{tpu_custom_call.1} parent=15 // pred_fallthru
          _
        // Predicated region
        $region21: #{tpu_custom_call.1} parent=15 // pred_check
          %p194 = pneg %p69
        $region22: #{tpu_custom_call.1} parent=15 // pred_check_branch
          %196 = sbr.rel (%p194) target = $region24
        $region23: #{tpu_custom_call.1} parent=15 // pred_region
          %s197 = sand.u32 %s59, 1
          %s198 = scalar_lea.sflag [#allocation8], %s197
          %s199 = sand.u32 %s59, 1
          %s200 = smul.addr %s199, 48
          %s201 = scalar_lea.vmem [#allocation7], %s200
          %203 = vsyncadd %s198, 0
          %s204 = smul.addr %s23, 6
          %s205 = smul.addr %s204, 8
          %s206 = scalar_lea.hbm %s1, %s205
          %s207 = sshll.u32 %s206, 4
          %s208 = int_to_ptr.hbm [resolvable:$true] %s207
          %s209 = sshll.u32 %s201, 4
          %s210 = int_to_ptr.vmem [resolvable:$true] %s209
          %215 = dma.hbm_to_vmem [thread:$0]  %s208, 768, %s210, %s198, 128, 128, 8
        $region24: #{tpu_custom_call.1} parent=15 // pred_fallthru
          _
      $region16: #{tpu_custom_call.1} parent=5 // pred_fallthru
        _
      %p216 = scmp.le.s32.totalorder 1, %s23
      %p217 = scmp.lt.s32.totalorder %s23, 3
      %p218 = pnand %p216, %p217
      %p219 = pneg %p218
      // Predicated region
      $region25: #{tpu_custom_call.1} parent=5 // pred_check
        _
      $region26: #{tpu_custom_call.1} parent=5 // pred_check_branch
        %221 = sbr.rel (%p218) target = $region28
      $region27: #{tpu_custom_call.1} parent=5 // pred_region
        %s222 = ssub.s32 %s23, 1
        %s223 = sand.u32 %s36, 1
        %s224 = scalar_lea.sflag [#allocation5], %s223
        %s225 = sand.u32 %s36, 1
        %s226 = smul.addr %s225, 48
        %s227 = scalar_lea.vmem [#allocation4], %s226
        // Predicated region
        $region29: #{tpu_custom_call.1} parent=27 // pred_check
          %p228 = pneg %p49
        $region30: #{tpu_custom_call.1} parent=27 // pred_check_branch
          %230 = sbr.rel (%p228) target = $region32
        $region31: #{tpu_custom_call.1} parent=27 // pred_region
          %232 = dma.done %s224, 768
        $region32: #{tpu_custom_call.1} parent=27 // pred_fallthru
          _
        %s233 = sand.u32 %s62, 1
        %s234 = scalar_lea.sflag [#allocation8], %s233
        %s235 = sand.u32 %s62, 1
        %s236 = smul.addr %s235, 48
        %s237 = scalar_lea.vmem [#allocation7], %s236
        // Predicated region
        $region33: #{tpu_custom_call.1} parent=27 // pred_check
          %p238 = pneg %p75
        $region34: #{tpu_custom_call.1} parent=27 // pred_check_branch
          %240 = sbr.rel (%p238) target = $region36
        $region35: #{tpu_custom_call.1} parent=27 // pred_region
          %242 = dma.done %s234, 768
        $region36: #{tpu_custom_call.1} parent=27 // pred_fallthru
          _
        %s243 = sand.u32 %s36, 1
        %s244 = scalar_lea.sflag [#allocation5], %s243
        %s245 = sand.u32 %s36, 1
        %s246 = smul.addr %s245, 48
        %s247 = scalar_lea.vmem [#allocation4], %s246
        %p248 = pneg %p49
        %p249 = pneg %p46
        %s250 = sand.u32 %s62, 1
        %s251 = scalar_lea.sflag [#allocation8], %s250
        %s252 = sand.u32 %s62, 1
        %s253 = smul.addr %s252, 48
        %s254 = scalar_lea.vmem [#allocation7], %s253
        %p255 = pneg %p75
        %p256 = pneg %p72
        %p257 = pneg %p101
        %p258 = pneg %p98
        %s259 = sand.u32 %s88, 1
        %s260 = scalar_lea.sflag [#allocation6], %s259
        %s261 = sand.u32 %s88, 1
        %s262 = smul.addr %s261, 48
        %s263 = scalar_lea.vmem [#allocation9], %s262
        %p264 = pneg %p127
        %p265 = pneg %p124
        %s266 = sand.u32 %s28, 1
        %s267 = scalar_lea.sflag [#allocation11], %s266
        %s268 = sand.u32 %s114, 1
        %s269 = smul.addr %s268, 48
        %s270 = scalar_lea.vmem [#allocation10], %s269
        %p271 = pneg %p153
        %p272 = pneg %p150
        %s273 = sand.u32 %s28, 1
        %s274 = scalar_lea.sflag [#allocation11], %s273
        %s275 = sand.u32 %s140, 1
        %s276 = smul.addr %s275, 48
        %s277 = scalar_lea.vmem [#allocation12], %s276
        %vm278 = vcmask 162816
        %279 = vst.msk [vmem:[#allocation2] sm:$0xff] %vm278, 0.0
        %280 = vst.msk [vmem:[#allocation2 + $0x8] sm:$0xff] %vm278, 0.0
        %281 = vst.msk [vmem:[#allocation2 + $0x10] sm:$0xff] %vm278, 0.0
        %282 = vst.msk [vmem:[#allocation2 + $0x18] sm:$0xff] %vm278, 0.0
        %283 = vst.msk [vmem:[#allocation2 + $0x20] sm:$0xff] %vm278, 0.0
        %284 = vst.msk [vmem:[#allocation2 + $0x28] sm:$0xff] %vm278, 0.0
        %vm285 = vcmask 130048
        %286 = vst.msk [vmem:[#allocation3] sm:$0xff] %vm285, 0.0
        %287 = vst.msk [vmem:[#allocation3 + $0x8] sm:$0xff] %vm285, 0.0
        %vm288 = vcmask 125952
        %289 = vst.msk [vmem:[#allocation3 + $0x10] sm:$0xf] %vm288, 0.0
        %290 = vst.msk [vmem:[#allocation3 + $0x18] sm:$0xff] %vm285, 0.0
        %291 = vst.msk [vmem:[#allocation3 + $0x20] sm:$0xff] %vm285, 0.0
        %292 = vst.msk [vmem:[#allocation3 + $0x28] sm:$0xf] %vm288, 0.0
        %293 = vst.msk [vmem:[#allocation3 + $0x30] sm:$0xff] %vm285, 0.0
        %294 = vst.msk [vmem:[#allocation3 + $0x38] sm:$0xff] %vm285, 0.0
        %295 = vst.msk [vmem:[#allocation3 + $0x40] sm:$0xf] %vm288, 0.0
        %v296 = vld [vmem:[%s237] sm:$0xff]
        %v297 = vld [vmem:[%s237 + $0x8] sm:$0xff]
        %v298 = vld [vmem:[%s237 + $0x10] sm:$0xff]
        %v299 = vld [vmem:[%s237 + $0x18] sm:$0xff]
        %v300 = vld [vmem:[%s237 + $0x20] sm:$0xff]
        %v301 = vld [vmem:[%s237 + $0x28] sm:$0xff]
        %v302 = vld [vmem:[%s227] sm:$0xff]
        %v303 = vld [vmem:[%s227 + $0x8] sm:$0xff]
        %v304 = vld [vmem:[%s227 + $0x10] sm:$0xff]
        %v305 = vld [vmem:[%s227 + $0x18] sm:$0xff]
        %v306 = vld [vmem:[%s227 + $0x20] sm:$0xff]
        %v307 = vld [vmem:[%s227 + $0x28] sm:$0xff]
        %314 = vrot.lane.b32.xlu0 %v302, 2
        %v315 = vpop.permute.xlu0 %314
        %316 = vrot.lane.b32.xlu0 %v303, 2
        %v317 = vpop.permute.xlu0 %316
        %318 = vrot.lane.b32.xlu0 %v304, 2
        %v319 = vpop.permute.xlu0 %318
        %320 = vrot.lane.b32.xlu0 %v305, 2
        %v321 = vpop.permute.xlu0 %320
        %322 = vrot.lane.b32.xlu0 %v306, 2
        %v323 = vpop.permute.xlu0 %322
        %324 = vrot.lane.b32.xlu0 %v307, 2
        %v325 = vpop.permute.xlu0 %324
        %vm332 = vcmask 146448
        %333 = vst.msk [vmem:[#allocation2] sm:$0xff] %vm332, %v315
        %334 = vst.msk [vmem:[#allocation2 + $0x8] sm:$0xff] %vm332, %v317
        %335 = vst.msk [vmem:[#allocation2 + $0x10] sm:$0xff] %vm332, %v319
        %336 = vst.msk [vmem:[#allocation2 + $0x18] sm:$0xff] %vm332, %v321
        %337 = vst.msk [vmem:[#allocation2 + $0x20] sm:$0xff] %vm332, %v323
        %338 = vst.msk [vmem:[#allocation2 + $0x28] sm:$0xff] %vm332, %v325
        %v339 = vld [vmem:[#allocation2] sm:$0xff]
        %v340 = vld [vmem:[#allocation2 + $0x8] sm:$0xff]
        %v341 = vld [vmem:[#allocation2 + $0x10] sm:$0xff]
        %v342 = vld [vmem:[#allocation2 + $0x18] sm:$0xff]
        %v343 = vld [vmem:[#allocation2 + $0x20] sm:$0xff]
        %v344 = vld [vmem:[#allocation2 + $0x28] sm:$0xff]
        %v345 = vmul.f32 %v339, 0.017873362
        %v346 = vmul.f32 %v340, 0.017873362
        %v347 = vmul.f32 %v341, 0.017873362
        %v348 = vmul.f32 %v342, 0.017873362
        %v349 = vmul.f32 %v343, 0.017873362
        %v350 = vmul.f32 %v344, 0.017873362
        %v351 = vadd.f32 %v345, 0.0
        %v352 = vadd.f32 %v346, 0.0
        %v353 = vadd.f32 %v347, 0.0
        %v354 = vadd.f32 %v348, 0.0
        %v355 = vadd.f32 %v349, 0.0
        %v356 = vadd.f32 %v350, 0.0
        %v357 = vmul.f32 %v339, 0.13206726
        %v358 = vmul.f32 %v340, 0.13206726
        %v359 = vmul.f32 %v341, 0.13206726
        %v360 = vmul.f32 %v342, 0.13206726
        %v361 = vmul.f32 %v343, 0.13206726
        %v362 = vmul.f32 %v344, 0.13206726
        %369 = vrot.lane.b32.xlu0 %v357, 127
        %v370 = vpop.permute.xlu0 %369
        %371 = vrot.lane.b32.xlu0 %v358, 127
        %v372 = vpop.permute.xlu0 %371
        %373 = vrot.lane.b32.xlu0 %v359, 127
        %v374 = vpop.permute.xlu0 %373
        %375 = vrot.lane.b32.xlu0 %v360, 127
        %v376 = vpop.permute.xlu0 %375
        %377 = vrot.lane.b32.xlu0 %v361, 127
        %v378 = vpop.permute.xlu0 %377
        %379 = vrot.lane.b32.xlu0 %v362, 127
        %v380 = vpop.permute.xlu0 %379
        %v387 = vadd.f32 %v351, %v370
        %v388 = vadd.f32 %v352, %v372
        %v389 = vadd.f32 %v353, %v374
        %v390 = vadd.f32 %v354, %v376
        %v391 = vadd.f32 %v355, %v378
        %v392 = vadd.f32 %v356, %v380
        %v393 = vmul.f32 %v339, 0.35899606
        %v394 = vmul.f32 %v340, 0.35899606
        %v395 = vmul.f32 %v341, 0.35899606
        %v396 = vmul.f32 %v342, 0.35899606
        %v397 = vmul.f32 %v343, 0.35899606
        %v398 = vmul.f32 %v344, 0.35899606
        %405 = vrot.lane.b32.xlu0 %v393, 126
        %v406 = vpop.permute.xlu0 %405
        %407 = vrot.lane.b32.xlu0 %v394, 126
        %v408 = vpop.permute.xlu0 %407
        %409 = vrot.lane.b32.xlu0 %v395, 126
        %v410 = vpop.permute.xlu0 %409
        %411 = vrot.lane.b32.xlu0 %v396, 126
        %v412 = vpop.permute.xlu0 %411
        %413 = vrot.lane.b32.xlu0 %v397, 126
        %v414 = vpop.permute.xlu0 %413
        %415 = vrot.lane.b32.xlu0 %v398, 126
        %v416 = vpop.permute.xlu0 %415
        %v423 = vadd.f32 %v387, %v406
        %v424 = vadd.f32 %v388, %v408
        %v425 = vadd.f32 %v389, %v410
        %v426 = vadd.f32 %v390, %v412
        %v427 = vadd.f32 %v391, %v414
        %v428 = vadd.f32 %v392, %v416
        %429 = vrot.lane.b32.xlu0 %v393, 125
        %v430 = vpop.permute.xlu0 %429
        %431 = vrot.lane.b32.xlu0 %v394, 125
        %v432 = vpop.permute.xlu0 %431
        %433 = vrot.lane.b32.xlu0 %v395, 125
        %v434 = vpop.permute.xlu0 %433
        %435 = vrot.lane.b32.xlu0 %v396, 125
        %v436 = vpop.permute.xlu0 %435
        %437 = vrot.lane.b32.xlu0 %v397, 125
        %v438 = vpop.permute.xlu0 %437
        %439 = vrot.lane.b32.xlu0 %v398, 125
        %v440 = vpop.permute.xlu0 %439
        %v447 = vadd.f32 %v423, %v430
        %v448 = vadd.f32 %v424, %v432
        %v449 = vadd.f32 %v425, %v434
        %v450 = vadd.f32 %v426, %v436
        %v451 = vadd.f32 %v427, %v438
        %v452 = vadd.f32 %v428, %v440
        %453 = vrot.lane.b32.xlu0 %v357, 124
        %v454 = vpop.permute.xlu0 %453
        %455 = vrot.lane.b32.xlu0 %v358, 124
        %v456 = vpop.permute.xlu0 %455
        %457 = vrot.lane.b32.xlu0 %v359, 124
        %v458 = vpop.permute.xlu0 %457
        %459 = vrot.lane.b32.xlu0 %v360, 124
        %v460 = vpop.permute.xlu0 %459
        %461 = vrot.lane.b32.xlu0 %v361, 124
        %v462 = vpop.permute.xlu0 %461
        %463 = vrot.lane.b32.xlu0 %v362, 124
        %v464 = vpop.permute.xlu0 %463
        %v471 = vadd.f32 %v447, %v454
        %v472 = vadd.f32 %v448, %v456
        %v473 = vadd.f32 %v449, %v458
        %v474 = vadd.f32 %v450, %v460
        %v475 = vadd.f32 %v451, %v462
        %v476 = vadd.f32 %v452, %v464
        %477 = vst.msk [vmem:[#allocation3 + $0x2] sm:$0xff] %vm285, %v471
        %478 = vst.msk [vmem:[#allocation3 + $0xa] sm:$0xff] %vm285, %v472
        %479 = vst.msk [vmem:[#allocation3 + $0x1a] sm:$0xff] %vm285, %v473
        %480 = vst.msk [vmem:[#allocation3 + $0x22] sm:$0xff] %vm285, %v474
        %481 = vst.msk [vmem:[#allocation3 + $0x32] sm:$0xff] %vm285, %v475
        %482 = vst.msk [vmem:[#allocation3 + $0x3a] sm:$0xff] %vm285, %v476
        %v483 = vld [vmem:[#allocation3] sm:$0xff]
        %v484 = vld [vmem:[#allocation3 + $0x8] sm:$0xff]
        %v485 = vld [vmem:[#allocation3 + $0x18] sm:$0xff]
        %v486 = vld [vmem:[#allocation3 + $0x20] sm:$0xff]
        %v487 = vld [vmem:[#allocation3 + $0x30] sm:$0xff]
        %v488 = vld [vmem:[#allocation3 + $0x38] sm:$0xff]
        %v489 = vmul.f32 %v483, 0.017873362
        %v490 = vmul.f32 %v484, 0.017873362
        %v491 = vmul.f32 %v485, 0.017873362
        %v492 = vmul.f32 %v486, 0.017873362
        %v493 = vmul.f32 %v487, 0.017873362
        %v494 = vmul.f32 %v488, 0.017873362
        %v495 = vadd.f32 %v489, 0.0
        %v496 = vadd.f32 %v490, 0.0
        %v497 = vadd.f32 %v491, 0.0
        %v498 = vadd.f32 %v492, 0.0
        %v499 = vadd.f32 %v493, 0.0
        %v500 = vadd.f32 %v494, 0.0
        %v501 = vld [vmem:[#allocation3 + $0x1] sm:$0xff]
        %v502 = vld [vmem:[#allocation3 + $0x9] sm:$0xff]
        %v503 = vld [vmem:[#allocation3 + $0x19] sm:$0xff]
        %v504 = vld [vmem:[#allocation3 + $0x21] sm:$0xff]
        %v505 = vld [vmem:[#allocation3 + $0x31] sm:$0xff]
        %v506 = vld [vmem:[#allocation3 + $0x39] sm:$0xff]
        %v507 = vmul.f32 %v501, 0.13206726
        %v508 = vmul.f32 %v502, 0.13206726
        %v509 = vmul.f32 %v503, 0.13206726
        %v510 = vmul.f32 %v504, 0.13206726
        %v511 = vmul.f32 %v505, 0.13206726
        %v512 = vmul.f32 %v506, 0.13206726
        %v513 = vadd.f32 %v495, %v507
        %v514 = vadd.f32 %v496, %v508
        %v515 = vadd.f32 %v497, %v509
        %v516 = vadd.f32 %v498, %v510
        %v517 = vadd.f32 %v499, %v511
        %v518 = vadd.f32 %v500, %v512
        %v519 = vld [vmem:[#allocation3 + $0x2] sm:$0xff]
        %v520 = vld [vmem:[#allocation3 + $0xa] sm:$0xff]
        %v521 = vld [vmem:[#allocation3 + $0x1a] sm:$0xff]
        %v522 = vld [vmem:[#allocation3 + $0x22] sm:$0xff]
        %v523 = vld [vmem:[#allocation3 + $0x32] sm:$0xff]
        %v524 = vld [vmem:[#allocation3 + $0x3a] sm:$0xff]
        %v525 = vmul.f32 %v519, 0.35899606
        %v526 = vmul.f32 %v520, 0.35899606
        %v527 = vmul.f32 %v521, 0.35899606
        %v528 = vmul.f32 %v522, 0.35899606
        %v529 = vmul.f32 %v523, 0.35899606
        %v530 = vmul.f32 %v524, 0.35899606
        %v531 = vadd.f32 %v513, %v525
        %v532 = vadd.f32 %v514, %v526
        %v533 = vadd.f32 %v515, %v527
        %v534 = vadd.f32 %v516, %v528
        %v535 = vadd.f32 %v517, %v529
        %v536 = vadd.f32 %v518, %v530
        %v537 = vld [vmem:[#allocation3 + $0x3] sm:$0xff]
        %v538 = vld [vmem:[#allocation3 + $0xb] sm:$0xff]
        %v539 = vld [vmem:[#allocation3 + $0x1b] sm:$0xff]
        %v540 = vld [vmem:[#allocation3 + $0x23] sm:$0xff]
        %v541 = vld [vmem:[#allocation3 + $0x33] sm:$0xff]
        %v542 = vld [vmem:[#allocation3 + $0x3b] sm:$0xff]
        %v543 = vmul.f32 %v537, 0.35899606
        %v544 = vmul.f32 %v538, 0.35899606
        %v545 = vmul.f32 %v539, 0.35899606
        %v546 = vmul.f32 %v540, 0.35899606
        %v547 = vmul.f32 %v541, 0.35899606
        %v548 = vmul.f32 %v542, 0.35899606
        %v549 = vadd.f32 %v531, %v543
        %v550 = vadd.f32 %v532, %v544
        %v551 = vadd.f32 %v533, %v545
        %v552 = vadd.f32 %v534, %v546
        %v553 = vadd.f32 %v535, %v547
        %v554 = vadd.f32 %v536, %v548
        %v555 = vld [vmem:[#allocation3 + $0x4] sm:$0xff]
        %v556 = vld [vmem:[#allocation3 + $0xc] sm:$0xff]
        %v557 = vld [vmem:[#allocation3 + $0x1c] sm:$0xff]
        %v558 = vld [vmem:[#allocation3 + $0x24] sm:$0xff]
        %v559 = vld [vmem:[#allocation3 + $0x34] sm:$0xff]
        %v560 = vld [vmem:[#allocation3 + $0x3c] sm:$0xff]
        %v561 = vmul.f32 %v555, 0.13206726
        %v562 = vmul.f32 %v556, 0.13206726
        %v563 = vmul.f32 %v557, 0.13206726
        %v564 = vmul.f32 %v558, 0.13206726
        %v565 = vmul.f32 %v559, 0.13206726
        %v566 = vmul.f32 %v560, 0.13206726
        %v567 = vadd.f32 %v549, %v561
        %v568 = vadd.f32 %v550, %v562
        %v569 = vadd.f32 %v551, %v563
        %v570 = vadd.f32 %v552, %v564
        %v571 = vadd.f32 %v553, %v565
        %v572 = vadd.f32 %v554, %v566
        %579 = vrot.lane.b32.xlu0 %v296, 2
        %v580 = vpop.permute.xlu0 %579
        %581 = vrot.lane.b32.xlu0 %v297, 2
        %v582 = vpop.permute.xlu0 %581
        %583 = vrot.lane.b32.xlu0 %v298, 2
        %v584 = vpop.permute.xlu0 %583
        %585 = vrot.lane.b32.xlu0 %v299, 2
        %v586 = vpop.permute.xlu0 %585
        %587 = vrot.lane.b32.xlu0 %v300, 2
        %v588 = vpop.permute.xlu0 %587
        %589 = vrot.lane.b32.xlu0 %v301, 2
        %v590 = vpop.permute.xlu0 %589
        %597 = vst.msk [vmem:[#allocation2] sm:$0xff] %vm332, %v580
        %598 = vst.msk [vmem:[#allocation2 + $0x8] sm:$0xff] %vm332, %v582
        %599 = vst.msk [vmem:[#allocation2 + $0x10] sm:$0xff] %vm332, %v584
        %600 = vst.msk [vmem:[#allocation2 + $0x18] sm:$0xff] %vm332, %v586
        %601 = vst.msk [vmem:[#allocation2 + $0x20] sm:$0xff] %vm332, %v588
        %602 = vst.msk [vmem:[#allocation2 + $0x28] sm:$0xff] %vm332, %v590
        %v603 = vld [vmem:[#allocation2] sm:$0xff]
        %v604 = vld [vmem:[#allocation2 + $0x8] sm:$0xff]
        %v605 = vld [vmem:[#allocation2 + $0x10] sm:$0xff]
        %v606 = vld [vmem:[#allocation2 + $0x18] sm:$0xff]
        %v607 = vld [vmem:[#allocation2 + $0x20] sm:$0xff]
        %v608 = vld [vmem:[#allocation2 + $0x28] sm:$0xff]
        %v609 = vmul.f32 %v603, 0.017873362
        %v610 = vmul.f32 %v604, 0.017873362
        %v611 = vmul.f32 %v605, 0.017873362
        %v612 = vmul.f32 %v606, 0.017873362
        %v613 = vmul.f32 %v607, 0.017873362
        %v614 = vmul.f32 %v608, 0.017873362
        %v615 = vadd.f32 %v609, 0.0
        %v616 = vadd.f32 %v610, 0.0
        %v617 = vadd.f32 %v611, 0.0
        %v618 = vadd.f32 %v612, 0.0
        %v619 = vadd.f32 %v613, 0.0
        %v620 = vadd.f32 %v614, 0.0
        %v621 = vmul.f32 %v603, 0.13206726
        %v622 = vmul.f32 %v604, 0.13206726
        %v623 = vmul.f32 %v605, 0.13206726
        %v624 = vmul.f32 %v606, 0.13206726
        %v625 = vmul.f32 %v607, 0.13206726
        %v626 = vmul.f32 %v608, 0.13206726
        %633 = vrot.lane.b32.xlu0 %v621, 127
        %v634 = vpop.permute.xlu0 %633
        %635 = vrot.lane.b32.xlu0 %v622, 127
        %v636 = vpop.permute.xlu0 %635
        %637 = vrot.lane.b32.xlu0 %v623, 127
        %v638 = vpop.permute.xlu0 %637
        %639 = vrot.lane.b32.xlu0 %v624, 127
        %v640 = vpop.permute.xlu0 %639
        %641 = vrot.lane.b32.xlu0 %v625, 127
        %v642 = vpop.permute.xlu0 %641
        %643 = vrot.lane.b32.xlu0 %v626, 127
        %v644 = vpop.permute.xlu0 %643
        %v651 = vadd.f32 %v615, %v634
        %v652 = vadd.f32 %v616, %v636
        %v653 = vadd.f32 %v617, %v638
        %v654 = vadd.f32 %v618, %v640
        %v655 = vadd.f32 %v619, %v642
        %v656 = vadd.f32 %v620, %v644
        %v657 = vmul.f32 %v603, 0.35899606
        %v658 = vmul.f32 %v604, 0.35899606
        %v659 = vmul.f32 %v605, 0.35899606
        %v660 = vmul.f32 %v606, 0.35899606
        %v661 = vmul.f32 %v607, 0.35899606
        %v662 = vmul.f32 %v608, 0.35899606
        %669 = vrot.lane.b32.xlu0 %v657, 126
        %v670 = vpop.permute.xlu0 %669
        %671 = vrot.lane.b32.xlu0 %v658, 126
        %v672 = vpop.permute.xlu0 %671
        %673 = vrot.lane.b32.xlu0 %v659, 126
        %v674 = vpop.permute.xlu0 %673
        %675 = vrot.lane.b32.xlu0 %v660, 126
        %v676 = vpop.permute.xlu0 %675
        %677 = vrot.lane.b32.xlu0 %v661, 126
        %v678 = vpop.permute.xlu0 %677
        %679 = vrot.lane.b32.xlu0 %v662, 126
        %v680 = vpop.permute.xlu0 %679
        %v687 = vadd.f32 %v651, %v670
        %v688 = vadd.f32 %v652, %v672
        %v689 = vadd.f32 %v653, %v674
        %v690 = vadd.f32 %v654, %v676
        %v691 = vadd.f32 %v655, %v678
        %v692 = vadd.f32 %v656, %v680
        %693 = vrot.lane.b32.xlu0 %v657, 125
        %v694 = vpop.permute.xlu0 %693
        %695 = vrot.lane.b32.xlu0 %v658, 125
        %v696 = vpop.permute.xlu0 %695
        %697 = vrot.lane.b32.xlu0 %v659, 125
        %v698 = vpop.permute.xlu0 %697
        %699 = vrot.lane.b32.xlu0 %v660, 125
        %v700 = vpop.permute.xlu0 %699
        %701 = vrot.lane.b32.xlu0 %v661, 125
        %v702 = vpop.permute.xlu0 %701
        %703 = vrot.lane.b32.xlu0 %v662, 125
        %v704 = vpop.permute.xlu0 %703
        %v711 = vadd.f32 %v687, %v694
        %v712 = vadd.f32 %v688, %v696
        %v713 = vadd.f32 %v689, %v698
        %v714 = vadd.f32 %v690, %v700
        %v715 = vadd.f32 %v691, %v702
        %v716 = vadd.f32 %v692, %v704
        %717 = vrot.lane.b32.xlu0 %v621, 124
        %v718 = vpop.permute.xlu0 %717
        %719 = vrot.lane.b32.xlu0 %v622, 124
        %v720 = vpop.permute.xlu0 %719
        %721 = vrot.lane.b32.xlu0 %v623, 124
        %v722 = vpop.permute.xlu0 %721
        %723 = vrot.lane.b32.xlu0 %v624, 124
        %v724 = vpop.permute.xlu0 %723
        %725 = vrot.lane.b32.xlu0 %v625, 124
        %v726 = vpop.permute.xlu0 %725
        %727 = vrot.lane.b32.xlu0 %v626, 124
        %v728 = vpop.permute.xlu0 %727
        %v735 = vadd.f32 %v711, %v718
        %v736 = vadd.f32 %v712, %v720
        %v737 = vadd.f32 %v713, %v722
        %v738 = vadd.f32 %v714, %v724
        %v739 = vadd.f32 %v715, %v726
        %v740 = vadd.f32 %v716, %v728
        %741 = vst.msk [vmem:[#allocation3 + $0x2] sm:$0xff] %vm285, %v735
        %742 = vst.msk [vmem:[#allocation3 + $0xa] sm:$0xff] %vm285, %v736
        %743 = vst.msk [vmem:[#allocation3 + $0x1a] sm:$0xff] %vm285, %v737
        %744 = vst.msk [vmem:[#allocation3 + $0x22] sm:$0xff] %vm285, %v738
        %745 = vst.msk [vmem:[#allocation3 + $0x32] sm:$0xff] %vm285, %v739
        %746 = vst.msk [vmem:[#allocation3 + $0x3a] sm:$0xff] %vm285, %v740
        %v747 = vld [vmem:[#allocation3] sm:$0xff]
        %v748 = vld [vmem:[#allocation3 + $0x8] sm:$0xff]
        %v749 = vld [vmem:[#allocation3 + $0x18] sm:$0xff]
        %v750 = vld [vmem:[#allocation3 + $0x20] sm:$0xff]
        %v751 = vld [vmem:[#allocation3 + $0x30] sm:$0xff]
        %v752 = vld [vmem:[#allocation3 + $0x38] sm:$0xff]
        %v753 = vmul.f32 %v747, 0.017873362
        %v754 = vmul.f32 %v748, 0.017873362
        %v755 = vmul.f32 %v749, 0.017873362
        %v756 = vmul.f32 %v750, 0.017873362
        %v757 = vmul.f32 %v751, 0.017873362
        %v758 = vmul.f32 %v752, 0.017873362
        %v759 = vadd.f32 %v753, 0.0
        %v760 = vadd.f32 %v754, 0.0
        %v761 = vadd.f32 %v755, 0.0
        %v762 = vadd.f32 %v756, 0.0
        %v763 = vadd.f32 %v757, 0.0
        %v764 = vadd.f32 %v758, 0.0
        %v765 = vld [vmem:[#allocation3 + $0x1] sm:$0xff]
        %v766 = vld [vmem:[#allocation3 + $0x9] sm:$0xff]
        %v767 = vld [vmem:[#allocation3 + $0x19] sm:$0xff]
        %v768 = vld [vmem:[#allocation3 + $0x21] sm:$0xff]
        %v769 = vld [vmem:[#allocation3 + $0x31] sm:$0xff]
        %v770 = vld [vmem:[#allocation3 + $0x39] sm:$0xff]
        %v771 = vmul.f32 %v765, 0.13206726
        %v772 = vmul.f32 %v766, 0.13206726
        %v773 = vmul.f32 %v767, 0.13206726
        %v774 = vmul.f32 %v768, 0.13206726
        %v775 = vmul.f32 %v769, 0.13206726
        %v776 = vmul.f32 %v770, 0.13206726
        %v777 = vadd.f32 %v759, %v771
        %v778 = vadd.f32 %v760, %v772
        %v779 = vadd.f32 %v761, %v773
        %v780 = vadd.f32 %v762, %v774
        %v781 = vadd.f32 %v763, %v775
        %v782 = vadd.f32 %v764, %v776
        %v783 = vld [vmem:[#allocation3 + $0x2] sm:$0xff]
        %v784 = vld [vmem:[#allocation3 + $0xa] sm:$0xff]
        %v785 = vld [vmem:[#allocation3 + $0x1a] sm:$0xff]
        %v786 = vld [vmem:[#allocation3 + $0x22] sm:$0xff]
        %v787 = vld [vmem:[#allocation3 + $0x32] sm:$0xff]
        %v788 = vld [vmem:[#allocation3 + $0x3a] sm:$0xff]
        %v789 = vmul.f32 %v783, 0.35899606
        %v790 = vmul.f32 %v784, 0.35899606
        %v791 = vmul.f32 %v785, 0.35899606
        %v792 = vmul.f32 %v786, 0.35899606
        %v793 = vmul.f32 %v787, 0.35899606
        %v794 = vmul.f32 %v788, 0.35899606
        %v795 = vadd.f32 %v777, %v789
        %v796 = vadd.f32 %v778, %v790
        %v797 = vadd.f32 %v779, %v791
        %v798 = vadd.f32 %v780, %v792
        %v799 = vadd.f32 %v781, %v793
        %v800 = vadd.f32 %v782, %v794
        %v801 = vld [vmem:[#allocation3 + $0x3] sm:$0xff]
        %v802 = vld [vmem:[#allocation3 + $0xb] sm:$0xff]
        %v803 = vld [vmem:[#allocation3 + $0x1b] sm:$0xff]
        %v804 = vld [vmem:[#allocation3 + $0x23] sm:$0xff]
        %v805 = vld [vmem:[#allocation3 + $0x33] sm:$0xff]
        %v806 = vld [vmem:[#allocation3 + $0x3b] sm:$0xff]
        %v807 = vmul.f32 %v801, 0.35899606
        %v808 = vmul.f32 %v802, 0.35899606
        %v809 = vmul.f32 %v803, 0.35899606
        %v810 = vmul.f32 %v804, 0.35899606
        %v811 = vmul.f32 %v805, 0.35899606
        %v812 = vmul.f32 %v806, 0.35899606
        %v813 = vadd.f32 %v795, %v807
        %v814 = vadd.f32 %v796, %v808
        %v815 = vadd.f32 %v797, %v809
        %v816 = vadd.f32 %v798, %v810
        %v817 = vadd.f32 %v799, %v811
        %v818 = vadd.f32 %v800, %v812
        %v819 = vld [vmem:[#allocation3 + $0x4] sm:$0xff]
        %v820 = vld [vmem:[#allocation3 + $0xc] sm:$0xff]
        %v821 = vld [vmem:[#allocation3 + $0x1c] sm:$0xff]
        %v822 = vld [vmem:[#allocation3 + $0x24] sm:$0xff]
        %v823 = vld [vmem:[#allocation3 + $0x34] sm:$0xff]
        %v824 = vld [vmem:[#allocation3 + $0x3c] sm:$0xff]
        %v825 = vmul.f32 %v819, 0.13206726
        %v826 = vmul.f32 %v820, 0.13206726
        %v827 = vmul.f32 %v821, 0.13206726
        %v828 = vmul.f32 %v822, 0.13206726
        %v829 = vmul.f32 %v823, 0.13206726
        %v830 = vmul.f32 %v824, 0.13206726
        %v831 = vadd.f32 %v813, %v825
        %v832 = vadd.f32 %v814, %v826
        %v833 = vadd.f32 %v815, %v827
        %v834 = vadd.f32 %v816, %v828
        %v835 = vadd.f32 %v817, %v829
        %v836 = vadd.f32 %v818, %v830
        %v837 = vsub.f32 %v296, %v831
        %v838 = vsub.f32 %v297, %v832
        %v839 = vsub.f32 %v298, %v833
        %v840 = vsub.f32 %v299, %v834
        %v841 = vsub.f32 %v300, %v835
        %v842 = vsub.f32 %v301, %v836
        %843 = vst.msk [vmem:[%s263] sm:$0xff] %vm285, %v567
        %844 = vst.msk [vmem:[%s263 + $0x8] sm:$0xff] %vm285, %v568
        %845 = vst.msk [vmem:[%s263 + $0x10] sm:$0xff] %vm285, %v569
        %846 = vst.msk [vmem:[%s263 + $0x18] sm:$0xff] %vm285, %v570
        %847 = vst.msk [vmem:[%s263 + $0x20] sm:$0xff] %vm285, %v571
        %848 = vst.msk [vmem:[%s263 + $0x28] sm:$0xff] %vm285, %v572
        %849 = vst.msk [vmem:[%s270] sm:$0xff] %vm285, %v837
        %850 = vst.msk [vmem:[%s270 + $0x8] sm:$0xff] %vm285, %v838
        %851 = vst.msk [vmem:[%s270 + $0x10] sm:$0xff] %vm285, %v839
        %852 = vst.msk [vmem:[%s270 + $0x18] sm:$0xff] %vm285, %v840
        %853 = vst.msk [vmem:[%s270 + $0x20] sm:$0xff] %vm285, %v841
        %854 = vst.msk [vmem:[%s270 + $0x28] sm:$0xff] %vm285, %v842
        %v855 = vadd.f32 %v567, %v837
        %v856 = vadd.f32 %v568, %v838
        %v857 = vadd.f32 %v569, %v839
        %v858 = vadd.f32 %v570, %v840
        %v859 = vadd.f32 %v571, %v841
        %v860 = vadd.f32 %v572, %v842
        %v861 = vmax.f32 %v855, 0.0
        %v862 = vmax.f32 %v856, 0.0
        %v863 = vmax.f32 %v857, 0.0
        %v864 = vmax.f32 %v858, 0.0
        %v865 = vmax.f32 %v859, 0.0
        %v866 = vmax.f32 %v860, 0.0
        %v867 = vmin.f32 %v861, 1.0
        %v868 = vmin.f32 %v862, 1.0
        %v869 = vmin.f32 %v863, 1.0
        %v870 = vmin.f32 %v864, 1.0
        %v871 = vmin.f32 %v865, 1.0
        %v872 = vmin.f32 %v866, 1.0
        %873 = vst.msk [vmem:[%s277] sm:$0xff] %vm285, %v867
        %874 = vst.msk [vmem:[%s277 + $0x8] sm:$0xff] %vm285, %v868
        %875 = vst.msk [vmem:[%s277 + $0x10] sm:$0xff] %vm285, %v869
        %876 = vst.msk [vmem:[%s277 + $0x18] sm:$0xff] %vm285, %v870
        %877 = vst.msk [vmem:[%s277 + $0x20] sm:$0xff] %vm285, %v871
        %878 = vst.msk [vmem:[%s277 + $0x28] sm:$0xff] %vm285, %v872
        %s879 = sand.u32 %s88, 1
        %s880 = scalar_lea.sflag [#allocation6], %s879
        %s881 = sand.u32 %s88, 1
        %s882 = smul.addr %s881, 48
        %s883 = scalar_lea.vmem [#allocation9], %s882
        %s884 = sand.u32 %s28, 1
        %s885 = scalar_lea.sflag [#allocation11], %s884
        %s886 = sand.u32 %s114, 1
        %s887 = smul.addr %s886, 48
        %s888 = scalar_lea.vmem [#allocation10], %s887
        %s889 = sand.u32 %s28, 1
        %s890 = scalar_lea.sflag [#allocation11], %s889
        %s891 = sand.u32 %s140, 1
        %s892 = smul.addr %s891, 48
        %s893 = scalar_lea.vmem [#allocation12], %s892
        // Predicated region
        $region37: #{tpu_custom_call.1} parent=27 // pred_check
          %p894 = pneg %p98
        $region38: #{tpu_custom_call.1} parent=27 // pred_check_branch
          %896 = sbr.rel (%p894) target = $region40
        $region39: #{tpu_custom_call.1} parent=27 // pred_region
          %898 = vsyncadd %s880, 0
          %s899 = smul.addr %s28, 6
          %s900 = smul.addr %s899, 8
          %s901 = scalar_lea.hbm %s2, %s900
          %s902 = sshll.u32 %s883, 4
          %s903 = int_to_ptr.vmem [resolvable:$true] %s902
          %s904 = sshll.u32 %s901, 4
          %s905 = int_to_ptr.hbm [resolvable:$true] %s904
          %910 = dma.vmem_to_hbm [thread:$0]  %s903, 768, %s905, %s880, 128, 128, 8
        $region40: #{tpu_custom_call.1} parent=27 // pred_fallthru
          _
        // Predicated region
        $region41: #{tpu_custom_call.1} parent=27 // pred_check
          %p911 = pneg %p124
        $region42: #{tpu_custom_call.1} parent=27 // pred_check_branch
          %913 = sbr.rel (%p911) target = $region44
        $region43: #{tpu_custom_call.1} parent=27 // pred_region
          %915 = vsyncadd %s885, 0
          %s916 = smul.addr %s28, 6
          %s917 = smul.addr %s916, 8
          %s918 = scalar_lea.hbm %s3, %s917
          %s919 = sshll.u32 %s888, 4
          %s920 = int_to_ptr.vmem [resolvable:$true] %s919
          %s921 = sshll.u32 %s918, 4
          %s922 = int_to_ptr.hbm [resolvable:$true] %s921
          %927 = dma.vmem_to_hbm [thread:$0]  %s920, 768, %s922, %s885, 128, 128, 8
        $region44: #{tpu_custom_call.1} parent=27 // pred_fallthru
          _
        // Predicated region
        $region45: #{tpu_custom_call.1} parent=27 // pred_check
          %p928 = pneg %p150
        $region46: #{tpu_custom_call.1} parent=27 // pred_check_branch
          %930 = sbr.rel (%p928) target = $region48
        $region47: #{tpu_custom_call.1} parent=27 // pred_region
          %932 = vsyncadd %s890, 0
          %s933 = smul.addr %s28, 6
          %s934 = smul.addr %s933, 8
          %s935 = scalar_lea.hbm %s4, %s934
          %s936 = sshll.u32 %s893, 4
          %s937 = int_to_ptr.vmem [resolvable:$true] %s936
          %s938 = sshll.u32 %s935, 4
          %s939 = int_to_ptr.hbm [resolvable:$true] %s938
          %944 = dma.vmem_to_hbm [thread:$0]  %s937, 768, %s939, %s890, 128, 128, 8
        $region48: #{tpu_custom_call.1} parent=27 // pred_fallthru
          _
      $region28: #{tpu_custom_call.1} parent=5 // pred_fallthru
        _
      %p945 = scmp.le.s32.totalorder 2, %s23
      // Predicated region
      $region49: #{tpu_custom_call.1} parent=5 // pred_check
        %p946 = pneg %p945
      $region50: #{tpu_custom_call.1} parent=5 // pred_check_branch
        %948 = sbr.rel (%p946) target = $region52
      $region51: #{tpu_custom_call.1} parent=5 // pred_region
        %s949 = ssub.s32 %s23, 2
        // Predicated region
        $region53: #{tpu_custom_call.1} parent=51 // pred_check
          %p950 = pneg %p104
        $region54: #{tpu_custom_call.1} parent=51 // pred_check_branch
          %952 = sbr.rel (%p950) target = $region56
        $region55: #{tpu_custom_call.1} parent=51 // pred_region
          %s953 = sand.u32 %s89, 1
          %s954 = scalar_lea.sflag [#allocation6], %s953
          %s955 = sand.u32 %s89, 1
          %s956 = smul.addr %s955, 48
          %s957 = scalar_lea.vmem [#allocation9], %s956
          %959 = dma.done %s954, 768
        $region56: #{tpu_custom_call.1} parent=51 // pred_fallthru
          _
        // Predicated region
        $region57: #{tpu_custom_call.1} parent=51 // pred_check
          %p960 = pneg %p130
        $region58: #{tpu_custom_call.1} parent=51 // pred_check_branch
          %962 = sbr.rel (%p960) target = $region60
        $region59: #{tpu_custom_call.1} parent=51 // pred_region
          %s963 = sand.u32 %s29, 1
          %s964 = scalar_lea.sflag [#allocation11], %s963
          %s965 = sand.u32 %s115, 1
          %s966 = smul.addr %s965, 48
          %s967 = scalar_lea.vmem [#allocation10], %s966
          %969 = dma.done %s964, 768
        $region60: #{tpu_custom_call.1} parent=51 // pred_fallthru
          _
        // Predicated region
        $region61: #{tpu_custom_call.1} parent=51 // pred_check
          %p970 = pneg %p156
        $region62: #{tpu_custom_call.1} parent=51 // pred_check_branch
          %972 = sbr.rel (%p970) target = $region64
        $region63: #{tpu_custom_call.1} parent=51 // pred_region
          %s973 = sand.u32 %s29, 1
          %s974 = scalar_lea.sflag [#allocation11], %s973
          %s975 = sand.u32 %s141, 1
          %s976 = smul.addr %s975, 48
          %s977 = scalar_lea.vmem [#allocation12], %s976
          %979 = dma.done %s974, 768
        $region64: #{tpu_custom_call.1} parent=51 // pred_fallthru
          _
      $region52: #{tpu_custom_call.1} parent=5 // pred_fallthru
        _
    $region6: #{tpu_custom_call.1} parent=1 // loop_footer
      %s27 = sadd.s32 1, %s23
    $region7: #{tpu_custom_call.1} parent=1 // loop_footer_branch
      %22 = sbr.rel target = $region3
    $region8: #{tpu_custom_call.1} parent=1 // loop_exit
      _
    %980 = vsyncpa [#allocation5], 1
    %s981 = scalar_lea.sflag [#allocation5], 1
    %982 = vsyncpa %s981, 1
    %983 = vsyncpa [#allocation8], 1
    %s984 = scalar_lea.sflag [#allocation8], 1
    %985 = vsyncpa %s984, 1
    %986 = vsyncpa [#allocation6], 1
    %s987 = scalar_lea.sflag [#allocation6], 1
    %988 = vsyncpa %s987, 1
    %989 = vsyncpa [#allocation11], 1
    %s990 = scalar_lea.sflag [#allocation11], 1
    %991 = vsyncpa %s990, 1

</llo_original>
